<compile_context>
chip_gen: v5e
topology: v5e:2x2
jax: 0.10.0
libtpu: 0.0.40
codegen_flags: <defaults>
</compile_context>

<pallas_src>
import functools
from typing import NamedTuple

import jax
import jax.numpy as jnp
from jax.experimental import pallas as pl
from jax.experimental.pallas import tpu as pltpu

_LANES = 128
_SUBLANES = 8


def _round_up(x: int, m: int) -> int:
    return ((x + m - 1) // m) * m


def _vmem_capacity_bytes() -> int:
    """Per-core VMEM capacity; conservative 64 MiB (v7x) if the query fails."""
    try:
        return int(pltpu.get_tpu_info().vmem_capacity_bytes)
    except Exception:
        return 64 << 20


def _mxu_pad_granularity() -> int:
    """K/N padding granularity: 256 on v6e/v7x (2x256x256 MXU), 128 otherwise."""
    try:
        kind = jax.devices()[0].device_kind.lower()
    except Exception:
        return 128
    return 256 if ("v6" in kind or "v7" in kind) else 128


def _feature_pad(d: int, gran: int) -> int:
    # Dims >= the MXU width get padded to full-MXU multiples; small dims to 128.
    return _round_up(d, gran if d >= gran else _LANES)


# ----------------------------------------------------------------------------
# One-time parameter preparation (padding hoisted out of the forward pass).
# ----------------------------------------------------------------------------
class PreparedMLP1(NamedTuple):
    padded: tuple        # ((wp, bp), ...) lane/MXU zero-padded, wp is (d_in_p, d_out_p)
    in_dim: int          # natural input feature dim
    out_dim: int         # natural output feature dim
    padded_in: int       # padded input feature dim
    weight_bytes: int    # total padded weight+bias bytes (resident VMEM footprint)


def prepare_mlp1_params(params) -> PreparedMLP1:
    """Zero-pad every (w, b) once to lane/MXU-width multiples (exact math)."""
    gran = _mxu_pad_granularity()
    padded = []
    weight_bytes = 0
    for w, b in params:
        kp = _feature_pad(w.shape[0], gran)
        np_ = _feature_pad(w.shape[1], gran)
        wp = w if (kp, np_) == tuple(w.shape) else jnp.pad(
            w, ((0, kp - w.shape[0]), (0, np_ - w.shape[1])))
        bp = b if np_ == b.shape[1] else jnp.pad(b, ((0, 0), (0, np_ - b.shape[1])))
        padded.append((wp, bp))
        weight_bytes += wp.size * wp.dtype.itemsize + bp.size * bp.dtype.itemsize
    return PreparedMLP1(tuple(padded), params[0][0].shape[0],
                        params[-1][0].shape[1], padded[0][0].shape[0],
                        int(weight_bytes))


# ----------------------------------------------------------------------------
# Fused whole-MLP kernel: grid over M row tiles only; weights resident in VMEM.
# ----------------------------------------------------------------------------
def _fused_mlp_kernel(x_ref, *refs, num_layers: int):
    # refs = (w_0, b_0, ..., w_{L-1}, b_{L-1}, o_ref); w/b are whole-array VMEM refs.
    o_ref = refs[-1]
    h = x_ref[...]
    for i in range(num_layers):
        w = refs[2 * i][...]
        b = refs[2 * i + 1][...]
        # Single cast (only if dtypes differ, e.g. f32 activations + bf16 weights);
        # accumulation stays f32 via preferred_element_type.
        lhs = h if h.dtype == w.dtype else h.astype(w.dtype)
        h = jnp.dot(lhs, w, preferred_element_type=jnp.float32)
        h = h + b.astype(jnp.float32)
        if i < num_layers - 1:
            h = jnp.maximum(h, 0.0)
    o_ref[...] = h.astype(o_ref.dtype)


def mlp1_forward_fused(x, prepared: PreparedMLP1, *, tm: int = 256):
    M, d_in = x.shape
    assert d_in == prepared.in_dim
    padded = prepared.padded
    num_layers = len(padded)
    dp_in = padded[0][0].shape[0]
    np_last = padded[-1][0].shape[1]

    # Minimal M padding (sublane multiples only) split into near-equal row tiles;
    # force >=2 tiles when possible so v7x's two TensorCores both get work.
    m8 = _round_up(M, _SUBLANES)
    min_tiles = 2 if m8 >= 2 * _SUBLANES else 1
    n_tiles = max(pl.cdiv(m8, tm), min_tiles)
    tm_eff = _round_up(pl.cdiv(m8, n_tiles), _SUBLANES)
    mp = tm_eff * n_tiles

    xp = x if (mp, dp_in) == (M, d_in) else jnp.pad(
        x, ((0, mp - M), (0, dp_in - d_in)))

    itemsize = x.dtype.itemsize
    flops, max_feat = 0, dp_in
    for wp, _ in padded:
        flops += 2 * mp * wp.shape[0] * wp.shape[1]
        max_feat = max(max_feat, wp.shape[1])
    bytes_accessed = (xp.size * itemsize + mp * np_last * itemsize
                      + prepared.weight_bytes)

    # VMEM: single-buffered resident weights (whole-array VMEM operands are loaded
    # once, never double-buffered) + double-buffered x/out row tiles + f32
    # intermediates.  Limit is capped 8 MiB below physical VMEM (gen-aware).
    needed = (prepared.weight_bytes
              + 2 * (tm_eff * dp_in + tm_eff * np_last) * itemsize
              + 4 * tm_eff * max_feat * 4)
    cap = _vmem_capacity_bytes() - (8 << 20)
    vmem_limit = int(min(max(needed + (4 << 20), 16 << 20), cap))

    in_specs = [pl.BlockSpec((tm_eff, dp_in), lambda i: (i, 0))]
    args = [xp]
    for wp, bp in padded:
        # Whole-array VMEM residents == single-buffered (Buffered(1)-equivalent).
        in_specs.append(pl.BlockSpec(memory_space=pltpu.MemorySpace.VMEM))
        in_specs.append(pl.BlockSpec(memory_space=pltpu.MemorySpace.VMEM))
        args.extend((wp, bp))

    out = pl.pallas_call(
        functools.partial(_fused_mlp_kernel, num_layers=num_layers),
        out_shape=jax.ShapeDtypeStruct((mp, np_last), x.dtype),
        grid_spec=pltpu.PrefetchScalarGridSpec(
            num_scalar_prefetch=0,
            grid=(n_tiles,),
            in_specs=in_specs,
            out_specs=pl.BlockSpec((tm_eff, np_last), lambda i: (i, 0)),
        ),
        compiler_params=pltpu.CompilerParams(
            dimension_semantics=("parallel",),
            vmem_limit_bytes=vmem_limit,
        ),
        cost_estimate=pl.CostEstimate(
            flops=int(flops), transcendentals=0,
            bytes_accessed=int(bytes_accessed)),
    )(*args)
    return out[:M, :prepared.out_dim]


# ----------------------------------------------------------------------------
# Scalable per-layer path: M/N tiles + K-reduction grid axis with f32 accumulator.
# ----------------------------------------------------------------------------
def _linear_tiled_kernel(x_ref, w_ref, b_ref, o_ref, acc_ref, *, apply_relu: bool):
    k = pl.program_id(2)

    @pl.when(k == 0)
    def _init():
        acc_ref[...] = jnp.zeros_like(acc_ref)

    acc_ref[...] += jnp.dot(x_ref[...], w_ref[...],
                            preferred_element_type=jnp.float32)

    @pl.when(k == pl.num_programs(2) - 1)
    def _store():
        y = acc_ref[...] + b_ref[...].astype(jnp.float32)
        if apply_relu:
            y = jnp.maximum(y, 0.0)
        o_ref[...] = y.astype(o_ref.dtype)


def pallas_linear_tiled(x, w, b, *, apply_relu: bool,
                        tm: int = 512, tn: int = 512, tk: int = 512):
    """y = x @ w + b (optional ReLU). w is (K, N), ideally pre-padded to lane multiples."""
    M, K = x.shape
    K2, N = w.shape
    assert K == K2 and b.shape == (1, N)

    # M: pad to sublane multiples only, near-equal tiles (minimal wasted rows).
    m8 = _round_up(M, _SUBLANES)
    n_m = max(pl.cdiv(m8, tm), 1)
    tm_eff = _round_up(pl.cdiv(m8, n_m), _SUBLANES)
    mp = tm_eff * n_m

    tn_eff = max(_LANES, min(_round_up(tn, _LANES), _round_up(N, _LANES)))
    tk_eff = max(_LANES, min(_round_up(tk, _LANES), _round_up(K, _LANES)))
    kp = _round_up(K, tk_eff)
    npad = _round_up(N, tn_eff)

    # No-op when inputs are already padded (prepare_mlp1_params) and tiles divide.
    xp = x if (mp, kp) == (M, K) else jnp.pad(x, ((0, mp - M), (0, kp - K)))
    wp = w if (kp, npad) == (K, N) else jnp.pad(w, ((0, kp - K), (0, npad - N)))
    bp = b if npad == N else jnp.pad(b, ((0, 0), (0, npad - N)))

    grid = (mp // tm_eff, npad // tn_eff, kp // tk_eff)

    itemsize = x.dtype.itemsize
    flops = 2 * mp * kp * npad
    bytes_accessed = (xp.size * itemsize + wp.size * wp.dtype.itemsize
                      + bp.size * bp.dtype.itemsize + mp * npad * itemsize)
    needed = (2 * (tm_eff * tk_eff + tk_eff * tn_eff + tn_eff) * itemsize
              + 2 * tm_eff * tn_eff * itemsize
              + tm_eff * tn_eff * 4)
    cap = _vmem_capacity_bytes() - (8 << 20)
    vmem_limit = int(min(max(needed + (4 << 20), 16 << 20), cap))

    # TODO(synk): for very large M the (k, j)-indexed weight blocks are re-streamed
    # from HBM once per M tile; restructure with pltpu.emit_pipeline so a resident
    # N-slab of weights serves multiple M tiles in the memory-bound regime.
    out = pl.pallas_call(
        functools.partial(_linear_tiled_kernel, apply_relu=apply_relu),
        out_shape=jax.ShapeDtypeStruct((mp, npad), x.dtype),
        grid_spec=pltpu.PrefetchScalarGridSpec(
            num_scalar_prefetch=0,
            grid=grid,
            in_specs=[
                pl.BlockSpec((tm_eff, tk_eff), lambda i, j, k: (i, k)),
                pl.BlockSpec((tk_eff, tn_eff), lambda i, j, k: (k, j)),
                pl.BlockSpec((1, tn_eff), lambda i, j, k: (0, j)),
            ],
            out_specs=pl.BlockSpec((tm_eff, tn_eff), lambda i, j, k: (i, j)),
            scratch_shapes=[pltpu.VMEM((tm_eff, tn_eff), jnp.float32)],
        ),
        compiler_params=pltpu.CompilerParams(
            dimension_semantics=("parallel", "parallel", "arbitrary"),
            vmem_limit_bytes=vmem_limit,
        ),
        cost_estimate=pl.CostEstimate(
            flops=int(flops), transcendentals=0,
            bytes_accessed=int(bytes_accessed)),
    )(xp, wp, bp)
    return out[:M, :N]


# ----------------------------------------------------------------------------
# MLP1 forward + params + reference
# ----------------------------------------------------------------------------
def mlp1_forward(x, params, *, force_path=None, tm_fused: int = 256,
                 tm: int = 512, tn: int = 512, tk: int = 512):
    """Forward pass of MLP1: Linear -> ReLU ... -> Linear (no ReLU on last).

    `params` may be a raw list of (w, b) or a PreparedMLP1 (pad hoisted/cached)."""
    prepared = params if isinstance(params, PreparedMLP1) else prepare_mlp1_params(params)

    # Generation-aware gate: resident (single-buffered) weights may use ~60% of
    # per-core VMEM (~38 MiB on v7x, ~76 MiB on v5e/v6e); otherwise fall back to
    # the K/N-tiled per-layer path.
    fused_budget = int(_vmem_capacity_bytes() * 0.6)
    use_fused = (force_path == "fused") or (
        force_path is None and prepared.weight_bytes <= fused_budget)

    if use_fused:
        try:
            return mlp1_forward_fused(x, prepared, tm=tm_fused)
        except Exception:
            # Conservative guard: if the fused configuration over-subscribes VMEM
            # (or fails to lower) fall back to the always-safe tiled path.
            pass

    num_layers = len(prepared.padded)
    M, d_in = x.shape
    dp_in = prepared.padded_in
    h = x if dp_in == d_in else jnp.pad(x, ((0, 0), (0, dp_in - d_in)))
    for i, (wp, bp) in enumerate(prepared.padded):
        h = pallas_linear_tiled(h, wp, bp, apply_relu=(i < num_layers - 1),
                                tm=tm, tn=tn, tk=tk)
    return h[:, :prepared.out_dim]


def init_mlp1_params(key, input_dim, output_dim, hidden_dim, num_layers,
                     dtype=jnp.float32):
    """Synthetic init matching MLP1's layer shapes.

    Layer i: Linear(n_i, k_i) with [input_dim] + h -> h + [output_dim],
    h = [hidden_dim] * (num_layers - 1).  Weights stored as (n_i, k_i), i.e. already
    transposed relative to torch's (out, in); bias stored as (1, k_i).  Use
    dtype=jnp.bfloat16 on v6e/v7x to get bf16 MXU rates (accumulation stays f32)."""
    h = [hidden_dim] * (num_layers - 1)
    dims_in = [input_dim] + h
    dims_out = h + [output_dim]
    params = []
    for n, k in zip(dims_in, dims_out):
        key, wk, bk = jax.random.split(key, 3)
        bound = 1.0 / jnp.sqrt(n)
        w = jax.random.uniform(wk, (n, k), dtype, minval=-bound, maxval=bound)
        b = jax.random.uniform(bk, (1, k), dtype, minval=-bound, maxval=bound)
        params.append((w, b))
    return params


def mlp1_reference(x, params):
    num_layers = len(params)
    for i, (w, b) in enumerate(params):
        x = jnp.dot(x, w, precision=jax.lax.Precision.HIGHEST) + b
        if i < num_layers - 1:
            x = jnp.maximum(x, 0.0)
    return x


if __name__ == "__main__":
    key = jax.random.PRNGKey(0)

    # --- small shapes consistent with the module's forward: x is (batch, input_dim) ---
    batch, input_dim, hidden_dim, output_dim, num_layers = 16, 16, 32, 8, 3
    key, xk = jax.random.split(key)
    x = jax.random.normal(xk, (batch, input_dim), jnp.float32)
    params = init_mlp1_params(key, input_dim, output_dim, hidden_dim, num_layers)
    prepared = prepare_mlp1_params(params)          # padding hoisted: done once

    out = jax.block_until_ready(mlp1_forward(x, prepared))   # fused single-kernel path
    ref = mlp1_reference(x, params)
    assert out.shape == (batch, output_dim)
    assert jnp.allclose(out, ref, atol=1e-4, rtol=1e-4), "fused path mismatch"

    # --- larger shapes to exercise the scalable K/N-tiled per-layer path ---
    b2, d_in2, hid2, d_out2, layers2 = 384, 512, 512, 256, 3
    key, xk2 = jax.random.split(key)
    x2 = jax.random.normal(xk2, (b2, d_in2), jnp.float32)
    params2 = init_mlp1_params(key, d_in2, d_out2, hid2, layers2)
    prepared2 = prepare_mlp1_params(params2)
    out2 = jax.block_until_ready(mlp1_forward(x2, prepared2, force_path="tiled"))
    ref2 = mlp1_reference(x2, params2)
    assert out2.shape == (b2, d_out2)
    assert jnp.allclose(out2, ref2, atol=2e-3, rtol=2e-3), "tiled path mismatch"

    print("KERNEL_OK")
</pallas_src>

<mosaic_0001>
module attributes {stable_mosaic.version = 11 : i64} {
  func.func @_fused_mlp_kernel(%arg0: i32, %arg1: memref<8x128xf32, #tpu.memory_space<vmem>>, %arg2: memref<128x128xf32, #tpu.memory_space<vmem>>, %arg3: memref<1x128xf32, #tpu.memory_space<vmem>>, %arg4: memref<128x128xf32, #tpu.memory_space<vmem>>, %arg5: memref<1x128xf32, #tpu.memory_space<vmem>>, %arg6: memref<128x128xf32, #tpu.memory_space<vmem>>, %arg7: memref<1x128xf32, #tpu.memory_space<vmem>>, %arg8: memref<8x128xf32, #tpu.memory_space<vmem>>) attributes {dimension_semantics = [#tpu.dimension_semantics<parallel>], iteration_bounds = array<i64: 2>, scalar_prefetch = 0 : i64, scratch_operands = 0 : i64, tpu.core_type = #tpu.core_type<tc>, window_params = [{transform_indices = @transform_0, window_bounds = array<i64: 8, 128>}, {pipeline_mode = #tpu.pipeline_mode<synchronous>, transform_indices = @transform_1, window_bounds = array<i64: 128, 128>}, {pipeline_mode = #tpu.pipeline_mode<synchronous>, transform_indices = @transform_2, window_bounds = array<i64: 1, 128>}, {pipeline_mode = #tpu.pipeline_mode<synchronous>, transform_indices = @transform_3, window_bounds = array<i64: 128, 128>}, {pipeline_mode = #tpu.pipeline_mode<synchronous>, transform_indices = @transform_4, window_bounds = array<i64: 1, 128>}, {pipeline_mode = #tpu.pipeline_mode<synchronous>, transform_indices = @transform_5, window_bounds = array<i64: 128, 128>}, {pipeline_mode = #tpu.pipeline_mode<synchronous>, transform_indices = @transform_6, window_bounds = array<i64: 1, 128>}, {transform_indices = @transform_7, window_bounds = array<i64: 8, 128>}]} {
    %c0 = arith.constant 0 : index
    %c0_0 = arith.constant 0 : index
    %0 = vector.load %arg1[%c0, %c0_0] : memref<8x128xf32, #tpu.memory_space<vmem>>, vector<8x128xf32>
    %c0_1 = arith.constant 0 : index
    %c0_2 = arith.constant 0 : index
    %1 = vector.load %arg2[%c0_1, %c0_2] : memref<128x128xf32, #tpu.memory_space<vmem>>, vector<128x128xf32>
    %c0_3 = arith.constant 0 : index
    %c0_4 = arith.constant 0 : index
    %2 = vector.load %arg3[%c0_3, %c0_4] : memref<1x128xf32, #tpu.memory_space<vmem>>, vector<1x128xf32>
    %cst = arith.constant dense<0.000000e+00> : vector<8x128xf32>
    %3 = tpu.matmul %0, %1, %cst {dimension_numbers = #tpu.dot_dimension_numbers<[1], [0], [0], [1], [0, 0, 1, 1], [], []>} : vector<8x128xf32>, vector<128x128xf32>, vector<8x128xf32> -> vector<8x128xf32>
    %4 = vector.broadcast %2 : vector<1x128xf32> to vector<8x128xf32>
    %5 = arith.addf %3, %4 : vector<8x128xf32>
    %cst_5 = arith.constant 0.000000e+00 : f32
    %6 = vector.broadcast %cst_5 : f32 to vector<8x128xf32>
    %7 = arith.maximumf %5, %6 : vector<8x128xf32>
    %c0_6 = arith.constant 0 : index
    %c0_7 = arith.constant 0 : index
    %8 = vector.load %arg4[%c0_6, %c0_7] : memref<128x128xf32, #tpu.memory_space<vmem>>, vector<128x128xf32>
    %c0_8 = arith.constant 0 : index
    %c0_9 = arith.constant 0 : index
    %9 = vector.load %arg5[%c0_8, %c0_9] : memref<1x128xf32, #tpu.memory_space<vmem>>, vector<1x128xf32>
    %cst_10 = arith.constant dense<0.000000e+00> : vector<8x128xf32>
    %10 = tpu.matmul %7, %8, %cst_10 {dimension_numbers = #tpu.dot_dimension_numbers<[1], [0], [0], [1], [0, 0, 1, 1], [], []>} : vector<8x128xf32>, vector<128x128xf32>, vector<8x128xf32> -> vector<8x128xf32>
    %11 = vector.broadcast %9 : vector<1x128xf32> to vector<8x128xf32>
    %12 = arith.addf %10, %11 : vector<8x128xf32>
    %cst_11 = arith.constant 0.000000e+00 : f32
    %13 = vector.broadcast %cst_11 : f32 to vector<8x128xf32>
    %14 = arith.maximumf %12, %13 : vector<8x128xf32>
    %c0_12 = arith.constant 0 : index
    %c0_13 = arith.constant 0 : index
    %15 = vector.load %arg6[%c0_12, %c0_13] : memref<128x128xf32, #tpu.memory_space<vmem>>, vector<128x128xf32>
    %c0_14 = arith.constant 0 : index
    %c0_15 = arith.constant 0 : index
    %16 = vector.load %arg7[%c0_14, %c0_15] : memref<1x128xf32, #tpu.memory_space<vmem>>, vector<1x128xf32>
    %cst_16 = arith.constant dense<0.000000e+00> : vector<8x128xf32>
    %17 = tpu.matmul %14, %15, %cst_16 {dimension_numbers = #tpu.dot_dimension_numbers<[1], [0], [0], [1], [0, 0, 1, 1], [], []>} : vector<8x128xf32>, vector<128x128xf32>, vector<8x128xf32> -> vector<8x128xf32>
    %18 = vector.broadcast %16 : vector<1x128xf32> to vector<8x128xf32>
    %19 = arith.addf %17, %18 : vector<8x128xf32>
    %c0_17 = arith.constant 0 : index
    %c0_18 = arith.constant 0 : index
    %20 = vector.load %arg8[%c0_17, %c0_18] : memref<8x128xf32, #tpu.memory_space<vmem>>, vector<8x128xf32>
    tpu.vector_store %arg8[%c0_17, %c0_18], %19 {strides = array<i32>} : memref<8x128xf32, #tpu.memory_space<vmem>>, vector<8x128xf32>,
    return
  }
  func.func @transform_0(%arg0: i32) -> (i32, i32) {
    %c0_i32 = arith.constant 0 : i32
    %c0_i32_0 = arith.constant 0 : i32
    return %arg0, %c0_i32 : i32, i32
  }
  func.func @transform_1(%arg0: i32) -> (i32, i32) {
    %c0_i32 = arith.constant 0 : i32
    %c0_i32_0 = arith.constant 0 : i32
    %c0_i32_1 = arith.constant 0 : i32
    return %c0_i32, %c0_i32_0 : i32, i32
  }
  func.func @transform_2(%arg0: i32) -> (i32, i32) {
    %c0_i32 = arith.constant 0 : i32
    %c0_i32_0 = arith.constant 0 : i32
    %c0_i32_1 = arith.constant 0 : i32
    return %c0_i32, %c0_i32_0 : i32, i32
  }
  func.func @transform_3(%arg0: i32) -> (i32, i32) {
    %c0_i32 = arith.constant 0 : i32
    %c0_i32_0 = arith.constant 0 : i32
    %c0_i32_1 = arith.constant 0 : i32
    return %c0_i32, %c0_i32_0 : i32, i32
  }
  func.func @transform_4(%arg0: i32) -> (i32, i32) {
    %c0_i32 = arith.constant 0 : i32
    %c0_i32_0 = arith.constant 0 : i32
    %c0_i32_1 = arith.constant 0 : i32
    return %c0_i32, %c0_i32_0 : i32, i32
  }
  func.func @transform_5(%arg0: i32) -> (i32, i32) {
    %c0_i32 = arith.constant 0 : i32
    %c0_i32_0 = arith.constant 0 : i32
    %c0_i32_1 = arith.constant 0 : i32
    return %c0_i32, %c0_i32_0 : i32, i32
  }
  func.func @transform_6(%arg0: i32) -> (i32, i32) {
    %c0_i32 = arith.constant 0 : i32
    %c0_i32_0 = arith.constant 0 : i32
    %c0_i32_1 = arith.constant 0 : i32
    return %c0_i32, %c0_i32_0 : i32, i32
  }
  func.func @transform_7(%arg0: i32) -> (i32, i32) {
    %c0_i32 = arith.constant 0 : i32
    %c0_i32_0 = arith.constant 0 : i32
    return %arg0, %c0_i32 : i32, i32
  }
}

module attributes {stable_mosaic.version = 11 : i64} {
  func.func @_linear_tiled_kernel(%arg0: i32, %arg1: i32, %arg2: i32, %arg3: memref<16x128xf32, #tpu.memory_space<vmem>>, %arg4: memref<128x128xf32, #tpu.memory_space<vmem>>, %arg5: memref<1x128xf32, #tpu.memory_space<vmem>>, %arg6: memref<16x128xf32, #tpu.memory_space<vmem>>, %arg7: memref<16x128xf32, #tpu.memory_space<vmem>>) attributes {dimension_semantics = [#tpu.dimension_semantics<parallel>, #tpu.dimension_semantics<parallel>, #tpu.dimension_semantics<arbitrary>], iteration_bounds = array<i64: 1, 1, 1>, scalar_prefetch = 0 : i64, scratch_operands = 1 : i64, tpu.core_type = #tpu.core_type<tc>, window_params = [{transform_indices = @transform_0, window_bounds = array<i64: 16, 128>}, {transform_indices = @transform_1, window_bounds = array<i64: 128, 128>}, {transform_indices = @transform_2, window_bounds = array<i64: 1, 128>}, {transform_indices = @transform_3, window_bounds = array<i64: 16, 128>}]} {
    %c0_i32 = arith.constant 0 : i32
    %0 = arith.cmpi eq, %arg2, %c0_i32 : i32
    %1 = arith.extui %0 : i1 to i32
    %c0_i32_0 = arith.constant 0 : i32
    %2 = arith.cmpi ne, %1, %c0_i32_0 : i32
    scf.if %2 {
      %cst_10 = arith.constant 0.000000e+00 : f32
      %12 = vector.broadcast %cst_10 : f32 to vector<16x128xf32>
      %c0_11 = arith.constant 0 : index
      %c0_12 = arith.constant 0 : index
      %13 = vector.load %arg7[%c0_11, %c0_12] : memref<16x128xf32, #tpu.memory_space<vmem>>, vector<16x128xf32>
      tpu.vector_store %arg7[%c0_11, %c0_12], %12 {strides = array<i32>} : memref<16x128xf32, #tpu.memory_space<vmem>>, vector<16x128xf32>,
    } else {
    }
    %c0 = arith.constant 0 : index
    %c0_1 = arith.constant 0 : index
    %3 = vector.load %arg7[%c0, %c0_1] : memref<16x128xf32, #tpu.memory_space<vmem>>, vector<16x128xf32>
    %c0_2 = arith.constant 0 : index
    %c0_3 = arith.constant 0 : index
    %4 = vector.load %arg3[%c0_2, %c0_3] : memref<16x128xf32, #tpu.memory_space<vmem>>, vector<16x128xf32>
    %c0_4 = arith.constant 0 : index
    %c0_5 = arith.constant 0 : index
    %5 = vector.load %arg4[%c0_4, %c0_5] : memref<128x128xf32, #tpu.memory_space<vmem>>, vector<128x128xf32>
    %cst = arith.constant dense<0.000000e+00> : vector<16x128xf32>
    %6 = tpu.matmul %4, %5, %cst {dimension_numbers = #tpu.dot_dimension_numbers<[1], [0], [0], [1], [0, 0, 1, 1], [], []>} : vector<16x128xf32>, vector<128x128xf32>, vector<16x128xf32> -> vector<16x128xf32>
    %7 = arith.addf %3, %6 : vector<16x128xf32>
    %c0_6 = arith.constant 0 : index
    %c0_7 = arith.constant 0 : index
    %8 = vector.load %arg7[%c0_6, %c0_7] : memref<16x128xf32, #tpu.memory_space<vmem>>, vector<16x128xf32>
    tpu.vector_store %arg7[%c0_6, %c0_7], %7 {strides = array<i32>} : memref<16x128xf32, #tpu.memory_space<vmem>>, vector<16x128xf32>,
    %c0_i32_8 = arith.constant 0 : i32
    %9 = arith.cmpi eq, %arg2, %c0_i32_8 : i32
    %10 = arith.extui %9 : i1 to i32
    %c0_i32_9 = arith.constant 0 : i32
    %11 = arith.cmpi ne, %10, %c0_i32_9 : i32
    scf.if %11 {
      %c0_10 = arith.constant 0 : index
      %c0_11 = arith.constant 0 : index
      %12 = vector.load %arg7[%c0_10, %c0_11] : memref<16x128xf32, #tpu.memory_space<vmem>>, vector<16x128xf32>
      %c0_12 = arith.constant 0 : index
      %c0_13 = arith.constant 0 : index
      %13 = vector.load %arg5[%c0_12, %c0_13] : memref<1x128xf32, #tpu.memory_space<vmem>>, vector<1x128xf32>
      %14 = vector.broadcast %13 : vector<1x128xf32> to vector<16x128xf32>
      %15 = arith.addf %12, %14 : vector<16x128xf32>
      %cst_14 = arith.constant 0.000000e+00 : f32
      %16 = vector.broadcast %cst_14 : f32 to vector<16x128xf32>
      %17 = arith.maximumf %15, %16 : vector<16x128xf32>
      %c0_15 = arith.constant 0 : index
      %c0_16 = arith.constant 0 : index
      %18 = vector.load %arg6[%c0_15, %c0_16] : memref<16x128xf32, #tpu.memory_space<vmem>>, vector<16x128xf32>
      tpu.vector_store %arg6[%c0_15, %c0_16], %17 {strides = array<i32>} : memref<16x128xf32, #tpu.memory_space<vmem>>, vector<16x128xf32>,
    } else {
    }
    return
  }
  func.func @transform_0(%arg0: i32, %arg1: i32, %arg2: i32) -> (i32, i32) {
    %c0_i32 = arith.constant 0 : i32
    return %arg0, %arg2 : i32, i32
  }
  func.func @transform_1(%arg0: i32, %arg1: i32, %arg2: i32) -> (i32, i32) {
    %c0_i32 = arith.constant 0 : i32
    return %arg2, %arg1 : i32, i32
  }
  func.func @transform_2(%arg0: i32, %arg1: i32, %arg2: i32) -> (i32, i32) {
    %c0_i32 = arith.constant 0 : i32
    %c0_i32_0 = arith.constant 0 : i32
    return %c0_i32, %arg1 : i32, i32
  }
  func.func @transform_3(%arg0: i32, %arg1: i32, %arg2: i32) -> (i32, i32) {
    %c0_i32 = arith.constant 0 : i32
    return %arg0, %arg1 : i32, i32
  }
}

</mosaic_0001>

<llo_original>
// kernel: tpu_custom_call.1
$region0: #{tpu_custom_call.1}
  #allocation0 [shape = 'u32[]', space=smem, size = 0x4, offset = 0x4, fixed_abs, tag = 'smem constant byte address 0x4 - core index']
  #allocation1 [shape = 'u32[72,128]{1,0:T(1,128)}', space=vmem, size = 0x9000, scoped, tag = 'internal scratch']
  %s0 = inlined_call_operand.hbm [shape: f32[16,128], index: 0, kind: input, shape index: {}]
  %s1 = inlined_call_operand.hbm [shape: f32[128,128], index: 1, kind: input, shape index: {}]
  %s2 = inlined_call_operand.vmem [shape: f32[1,128], index: 2, kind: input, shape index: {}]
  %s3 = inlined_call_operand.hbm [shape: f32[128,128], index: 3, kind: input, shape index: {}]
  %s4 = inlined_call_operand.vmem [shape: f32[1,128], index: 4, kind: input, shape index: {}]
  %s5 = inlined_call_operand.hbm [shape: f32[128,128], index: 5, kind: input, shape index: {}]
  %s6 = inlined_call_operand.vmem [shape: f32[1,128], index: 6, kind: input, shape index: {}]
  %s7 = inlined_call_operand.hbm [shape: f32[16,128], index: 7, kind: output, shape index: {}]
  %s8 = sld [smem:[#allocation0]]
  $region77: #{tpu_custom_call.1} parent=0
    _
  %s10 = ssub.s32 1, %s8
  %s11 = scalar_select 0, %s10, %s8
  $region1: #{tpu_custom_call.1} parent=0
    #allocation2 [shape = 'u8[8192]{0}', space=vmem, size = 0x2000, scoped, tag = 'input window, operand 0']
    #allocation3 [shape = 's32[2]{0}', space=sflag, size = 0x8, scoped, tag = 'scoped memory for tpu_custom_call.1']
    #allocation4 [shape = 's32[2]{0}', space=sflag, size = 0x8, scoped, tag = 'scoped memory for tpu_custom_call.1']
    #allocation5 [shape = 'u8[65536]{0}', space=vmem, size = 0x10000, scoped, tag = 'input window, operand 1, single buffered']
    #allocation6 [shape = 's32[1]{0}', space=sflag, size = 0x4, scoped, tag = 'scoped memory for tpu_custom_call.1']
    #allocation7 [shape = 'u8[65536]{0}', space=vmem, size = 0x10000, scoped, tag = 'input window, operand 3, single buffered']
    #allocation8 [shape = 'u8[65536]{0}', space=vmem, size = 0x10000, scoped, tag = 'input window, operand 5, single buffered']
    #allocation9 [shape = 's32[1]{0}', space=sflag, size = 0x4, scoped, tag = 'scoped memory for tpu_custom_call.1']
    #allocation10 [shape = 'u8[8192]{0}', space=vmem, size = 0x2000, scoped, tag = 'output window, operand 0']
    %12 = vsyncpa [#allocation3], 0
    %s13 = scalar_lea.sflag [#allocation3], 1
    %14 = vsyncpa %s13, 0
    %15 = vsyncpa [#allocation6], 0
    %16 = vsyncpa [#allocation9], 0
    %17 = vsyncpa [#allocation4], 0
    %s18 = scalar_lea.sflag [#allocation4], 1
    %19 = vsyncpa %s18, 0
    loop: start=0, step=1, limit=4
    $region2: #{tpu_custom_call.1} parent=1 // loop_pre_header
      _
    $region3: #{tpu_custom_call.1} parent=1 // loop_header
      %s21 = sphi 0, %s25
      %p22 = scmp.ge.s32.totalorder %s21, 4
      %s31 = sphi 0, %s33
      %s34 = sphi 0, %s31
      %s35 = sphi 0, %s34
      %s51 = sphi 0, %s35
      %s55 = sphi 0, %s55
      %s57 = sphi 0, %s55
      %s58 = sphi 0, %s57
      %s72 = sphi 0, %s58
      %s76 = sphi 0, %s76
      %s78 = sphi 0, %s76
      %s79 = sphi 0, %s78
      %s93 = sphi 0, %s79
      %s97 = sphi 0, %s97
      %s99 = sphi 0, %s97
      %s100 = sphi 0, %s99
      %s114 = sphi 0, %s100
      %s118 = sphi 0, %s118
      %s120 = sphi 0, %s118
      %s121 = sphi 0, %s120
      %s135 = sphi 0, %s121
      %s139 = sphi 0, %s139
      %s141 = sphi 0, %s139
      %s142 = sphi 0, %s141
      %s156 = sphi 0, %s142
      %s160 = sphi 0, %s160
      %s162 = sphi 0, %s160
      %s163 = sphi 0, %s162
      %s177 = sphi 0, %s163
      %s183 = sphi 0, %s185
      %s186 = sphi 0, %s183
      %s187 = sphi 0, %s186
      %s203 = sphi 0, %s187
    $region4: #{tpu_custom_call.1} parent=1 // loop_header_branch
      %24 = sbr.rel (%p22) target = $region8
    $region5: #{tpu_custom_call.1} parent=1 // loop_body
      %s26 = ssub.s32 %s21, 1
      %s27 = ssub.s32 %s21, 2
      %s28 = sadd.s32 %s21, 1
      %s29 = ssub.s32 %s21, %s28
      %p30 = scmp.eq.s32.totalorder %s29, 0
      %s32 = sadd.s32 %s31, 1
      %s33 = scalar_select %p30, %s31, %s32
      %p36 = pneg %p30
      %p37 = scmp.eq.s32.totalorder %s21, 1
      %p38 = por %p36, %p37
      %p39 = scmp.ne.s32.totalorder %s31, %s34
      %p40 = scmp.eq.s32.totalorder %s21, 0
      %p41 = por %p39, %p40
      %p42 = scmp.ne.s32.totalorder %s31, %s34
      %p43 = scmp.eq.s32.totalorder %s26, 1
      %p44 = por %p42, %p43
      %p45 = scmp.ne.s32.totalorder %s34, %s35
      %p46 = scmp.eq.s32.totalorder %s26, 0
      %p47 = por %p45, %p46
      %p48 = scmp.ne.s32.totalorder %s34, %s35
      %p49 = scmp.eq.s32.totalorder %s27, 1
      %p50 = por %p48, %p49
      %p52 = scmp.ne.s32.totalorder %s35, %s51
      %p53 = scmp.eq.s32.totalorder %s27, 0
      %p54 = por %p52, %p53
      %s56 = sadd.s32 %s55, 1
      %p59 = scmp.eq.s32.totalorder %s21, 1
      %p60 = scmp.ne.s32.totalorder %s55, %s57
      %p61 = scmp.eq.s32.totalorder %s21, 0
      %p62 = por %p60, %p61
      %p63 = scmp.ne.s32.totalorder %s55, %s57
      %p64 = scmp.eq.s32.totalorder %s26, 1
      %p65 = por %p63, %p64
      %p66 = scmp.ne.s32.totalorder %s57, %s58
      %p67 = scmp.eq.s32.totalorder %s26, 0
      %p68 = por %p66, %p67
      %p69 = scmp.ne.s32.totalorder %s57, %s58
      %p70 = scmp.eq.s32.totalorder %s27, 1
      %p71 = por %p69, %p70
      %p73 = scmp.ne.s32.totalorder %s58, %s72
      %p74 = scmp.eq.s32.totalorder %s27, 0
      %p75 = por %p73, %p74
      %s77 = sadd.s32 %s76, 1
      %p80 = scmp.eq.s32.totalorder %s21, 1
      %p81 = scmp.ne.s32.totalorder %s76, %s78
      %p82 = scmp.eq.s32.totalorder %s21, 0
      %p83 = por %p81, %p82
      %p84 = scmp.ne.s32.totalorder %s76, %s78
      %p85 = scmp.eq.s32.totalorder %s26, 1
      %p86 = por %p84, %p85
      %p87 = scmp.ne.s32.totalorder %s78, %s79
      %p88 = scmp.eq.s32.totalorder %s26, 0
      %p89 = por %p87, %p88
      %p90 = scmp.ne.s32.totalorder %s78, %s79
      %p91 = scmp.eq.s32.totalorder %s27, 1
      %p92 = por %p90, %p91
      %p94 = scmp.ne.s32.totalorder %s79, %s93
      %p95 = scmp.eq.s32.totalorder %s27, 0
      %p96 = por %p94, %p95
      %s98 = sadd.s32 %s97, 1
      %p101 = scmp.eq.s32.totalorder %s21, 1
      %p102 = scmp.ne.s32.totalorder %s97, %s99
      %p103 = scmp.eq.s32.totalorder %s21, 0
      %p104 = por %p102, %p103
      %p105 = scmp.ne.s32.totalorder %s97, %s99
      %p106 = scmp.eq.s32.totalorder %s26, 1
      %p107 = por %p105, %p106
      %p108 = scmp.ne.s32.totalorder %s99, %s100
      %p109 = scmp.eq.s32.totalorder %s26, 0
      %p110 = por %p108, %p109
      %p111 = scmp.ne.s32.totalorder %s99, %s100
      %p112 = scmp.eq.s32.totalorder %s27, 1
      %p113 = por %p111, %p112
      %p115 = scmp.ne.s32.totalorder %s100, %s114
      %p116 = scmp.eq.s32.totalorder %s27, 0
      %p117 = por %p115, %p116
      %s119 = sadd.s32 %s118, 1
      %p122 = scmp.eq.s32.totalorder %s21, 1
      %p123 = scmp.ne.s32.totalorder %s118, %s120
      %p124 = scmp.eq.s32.totalorder %s21, 0
      %p125 = por %p123, %p124
      %p126 = scmp.ne.s32.totalorder %s118, %s120
      %p127 = scmp.eq.s32.totalorder %s26, 1
      %p128 = por %p126, %p127
      %p129 = scmp.ne.s32.totalorder %s120, %s121
      %p130 = scmp.eq.s32.totalorder %s26, 0
      %p131 = por %p129, %p130
      %p132 = scmp.ne.s32.totalorder %s120, %s121
      %p133 = scmp.eq.s32.totalorder %s27, 1
      %p134 = por %p132, %p133
      %p136 = scmp.ne.s32.totalorder %s121, %s135
      %p137 = scmp.eq.s32.totalorder %s27, 0
      %p138 = por %p136, %p137
      %s140 = sadd.s32 %s139, 1
      %p143 = scmp.eq.s32.totalorder %s21, 1
      %p144 = scmp.ne.s32.totalorder %s139, %s141
      %p145 = scmp.eq.s32.totalorder %s21, 0
      %p146 = por %p144, %p145
      %p147 = scmp.ne.s32.totalorder %s139, %s141
      %p148 = scmp.eq.s32.totalorder %s26, 1
      %p149 = por %p147, %p148
      %p150 = scmp.ne.s32.totalorder %s141, %s142
      %p151 = scmp.eq.s32.totalorder %s26, 0
      %p152 = por %p150, %p151
      %p153 = scmp.ne.s32.totalorder %s141, %s142
      %p154 = scmp.eq.s32.totalorder %s27, 1
      %p155 = por %p153, %p154
      %p157 = scmp.ne.s32.totalorder %s142, %s156
      %p158 = scmp.eq.s32.totalorder %s27, 0
      %p159 = por %p157, %p158
      %s161 = sadd.s32 %s160, 1
      %p164 = scmp.eq.s32.totalorder %s21, 1
      %p165 = scmp.ne.s32.totalorder %s160, %s162
      %p166 = scmp.eq.s32.totalorder %s21, 0
      %p167 = por %p165, %p166
      %p168 = scmp.ne.s32.totalorder %s160, %s162
      %p169 = scmp.eq.s32.totalorder %s26, 1
      %p170 = por %p168, %p169
      %p171 = scmp.ne.s32.totalorder %s162, %s163
      %p172 = scmp.eq.s32.totalorder %s26, 0
      %p173 = por %p171, %p172
      %p174 = scmp.ne.s32.totalorder %s162, %s163
      %p175 = scmp.eq.s32.totalorder %s27, 1
      %p176 = por %p174, %p175
      %p178 = scmp.ne.s32.totalorder %s163, %s177
      %p179 = scmp.eq.s32.totalorder %s27, 0
      %p180 = por %p178, %p179
      %s181 = ssub.s32 %s21, %s28
      %p182 = scmp.eq.s32.totalorder %s181, 0
      %s184 = sadd.s32 %s183, 1
      %s185 = scalar_select %p182, %s183, %s184
      %p188 = pneg %p182
      %p189 = scmp.eq.s32.totalorder %s21, 1
      %p190 = por %p188, %p189
      %p191 = scmp.ne.s32.totalorder %s183, %s186
      %p192 = scmp.eq.s32.totalorder %s21, 0
      %p193 = por %p191, %p192
      %p194 = scmp.ne.s32.totalorder %s183, %s186
      %p195 = scmp.eq.s32.totalorder %s26, 1
      %p196 = por %p194, %p195
      %p197 = scmp.ne.s32.totalorder %s186, %s187
      %p198 = scmp.eq.s32.totalorder %s26, 0
      %p199 = por %p197, %p198
      %p200 = scmp.ne.s32.totalorder %s186, %s187
      %p201 = scmp.eq.s32.totalorder %s27, 1
      %p202 = por %p200, %p201
      %p204 = scmp.ne.s32.totalorder %s187, %s203
      %p205 = scmp.eq.s32.totalorder %s27, 0
      %p206 = por %p204, %p205
      %p207 = scmp.le.s32.totalorder 1, %s21
      %p208 = scmp.lt.s32.totalorder %s21, 3
      %p209 = pnand %p207, %p208
      %p210 = pneg %p209
      // Predicated region
      $region9: #{tpu_custom_call.1} parent=5 // pred_check
        _
      $region10: #{tpu_custom_call.1} parent=5 // pred_check_branch
        %212 = sbr.rel (%p209) target = $region12
      $region11: #{tpu_custom_call.1} parent=5 // pred_region
        %s213 = ssub.s32 %s21, 1
        // Predicated region
        $region13: #{tpu_custom_call.1} parent=11 // pred_check
          %p214 = pneg %p68
        $region14: #{tpu_custom_call.1} parent=11 // pred_check_branch
          %216 = sbr.rel (%p214) target = $region16
        $region15: #{tpu_custom_call.1} parent=11 // pred_region
          %218 = vsyncadd [#allocation6], 0
          %s219 = sshll.u32 %s1, 4
          %s220 = int_to_ptr.hbm [resolvable:$true] %s219
          %s221 = sshll.u32 [#allocation5], 4
          %s222 = int_to_ptr.vmem [resolvable:$true] %s221
          %227 = dma.hbm_to_vmem [thread:$0]  %s220, 2048, %s222, [#allocation6], 128, 128, 8
        $region16: #{tpu_custom_call.1} parent=11 // pred_fallthru
          _
        // Predicated region
        $region17: #{tpu_custom_call.1} parent=11 // pred_check
          %p228 = pneg %p89
        $region18: #{tpu_custom_call.1} parent=11 // pred_check_branch
          %230 = sbr.rel (%p228) target = $region20
        $region19: #{tpu_custom_call.1} parent=11 // pred_region
          _
        $region20: #{tpu_custom_call.1} parent=11 // pred_fallthru
          _
        // Predicated region
        $region21: #{tpu_custom_call.1} parent=11 // pred_check
          %p231 = pneg %p110
        $region22: #{tpu_custom_call.1} parent=11 // pred_check_branch
          %233 = sbr.rel (%p231) target = $region24
        $region23: #{tpu_custom_call.1} parent=11 // pred_region
          %235 = vsyncadd [#allocation6], 0
          %s236 = sshll.u32 %s3, 4
          %s237 = int_to_ptr.hbm [resolvable:$true] %s236
          %s238 = sshll.u32 [#allocation7], 4
          %s239 = int_to_ptr.vmem [resolvable:$true] %s238
          %244 = dma.hbm_to_vmem [thread:$0]  %s237, 2048, %s239, [#allocation6], 128, 128, 8
        $region24: #{tpu_custom_call.1} parent=11 // pred_fallthru
          _
        // Predicated region
        $region25: #{tpu_custom_call.1} parent=11 // pred_check
          %p245 = pneg %p131
        $region26: #{tpu_custom_call.1} parent=11 // pred_check_branch
          %247 = sbr.rel (%p245) target = $region28
        $region27: #{tpu_custom_call.1} parent=11 // pred_region
          _
        $region28: #{tpu_custom_call.1} parent=11 // pred_fallthru
          _
        // Predicated region
        $region29: #{tpu_custom_call.1} parent=11 // pred_check
          %p248 = pneg %p152
        $region30: #{tpu_custom_call.1} parent=11 // pred_check_branch
          %250 = sbr.rel (%p248) target = $region32
        $region31: #{tpu_custom_call.1} parent=11 // pred_region
          %252 = vsyncadd [#allocation9], 0
          %s253 = sshll.u32 %s5, 4
          %s254 = int_to_ptr.hbm [resolvable:$true] %s253
          %s255 = sshll.u32 [#allocation8], 4
          %s256 = int_to_ptr.vmem [resolvable:$true] %s255
          %261 = dma.hbm_to_vmem [thread:$0]  %s254, 2048, %s256, [#allocation9], 128, 128, 8
        $region32: #{tpu_custom_call.1} parent=11 // pred_fallthru
          _
        // Predicated region
        $region33: #{tpu_custom_call.1} parent=11 // pred_check
          %p262 = pneg %p173
        $region34: #{tpu_custom_call.1} parent=11 // pred_check_branch
          %264 = sbr.rel (%p262) target = $region36
        $region35: #{tpu_custom_call.1} parent=11 // pred_region
          _
        $region36: #{tpu_custom_call.1} parent=11 // pred_fallthru
          _
      $region12: #{tpu_custom_call.1} parent=5 // pred_fallthru
        _
      %p265 = scmp.lt.s32.totalorder %s21, 2
      // Predicated region
      $region37: #{tpu_custom_call.1} parent=5 // pred_check
        %p266 = pneg %p265
      $region38: #{tpu_custom_call.1} parent=5 // pred_check_branch
        %268 = sbr.rel (%p266) target = $region40
      $region39: #{tpu_custom_call.1} parent=5 // pred_region
        // Predicated region
        $region41: #{tpu_custom_call.1} parent=39 // pred_check
          %p269 = pneg %p41
        $region42: #{tpu_custom_call.1} parent=39 // pred_check_branch
          %271 = sbr.rel (%p269) target = $region44
        $region43: #{tpu_custom_call.1} parent=39 // pred_region
          %s272 = sand.u32 %s31, 1
          %s273 = scalar_lea.sflag [#allocation3], %s272
          %s274 = sand.u32 %s31, 1
          %s275 = smul.addr %s274, 8
          %s276 = scalar_lea.vmem [#allocation2], %s275
          %278 = vsyncadd %s273, 0
          %s279 = smul.addr %s21, 8
          %s280 = scalar_lea.hbm %s0, %s279
          %s282 = sshll.u32 %s280, 4
          %s283 = int_to_ptr.hbm [resolvable:$true] %s282
          %s284 = sshll.u32 %s276, 4
          %s285 = int_to_ptr.vmem [resolvable:$true] %s284
          %287 = dma.hbm_to_vmem [thread:$0]  %s283, 128, %s285, %s273
        $region44: #{tpu_custom_call.1} parent=39 // pred_fallthru
          _
      $region40: #{tpu_custom_call.1} parent=5 // pred_fallthru
        _
      %p288 = scmp.le.s32.totalorder 1, %s21
      %p289 = scmp.lt.s32.totalorder %s21, 3
      %p290 = pnand %p288, %p289
      %p291 = pneg %p290
      // Predicated region
      $region45: #{tpu_custom_call.1} parent=5 // pred_check
        _
      $region46: #{tpu_custom_call.1} parent=5 // pred_check_branch
        %293 = sbr.rel (%p290) target = $region48
      $region47: #{tpu_custom_call.1} parent=5 // pred_region
        %s294 = ssub.s32 %s21, 1
        %s295 = sand.u32 %s34, 1
        %s296 = scalar_lea.sflag [#allocation3], %s295
        %s297 = sand.u32 %s34, 1
        %s298 = smul.addr %s297, 8
        %s299 = scalar_lea.vmem [#allocation2], %s298
        // Predicated region
        $region49: #{tpu_custom_call.1} parent=47 // pred_check
          %p300 = pneg %p47
        $region50: #{tpu_custom_call.1} parent=47 // pred_check_branch
          %302 = sbr.rel (%p300) target = $region52
        $region51: #{tpu_custom_call.1} parent=47 // pred_region
          %304 = dma.done %s296, 128
        $region52: #{tpu_custom_call.1} parent=47 // pred_fallthru
          _
        // Predicated region
        $region53: #{tpu_custom_call.1} parent=47 // pred_check
          %p305 = pneg %p68
        $region54: #{tpu_custom_call.1} parent=47 // pred_check_branch
          %307 = sbr.rel (%p305) target = $region56
        $region55: #{tpu_custom_call.1} parent=47 // pred_region
          %309 = dma.done [#allocation6], 2048
        $region56: #{tpu_custom_call.1} parent=47 // pred_fallthru
          _
        // Predicated region
        $region57: #{tpu_custom_call.1} parent=47 // pred_check
          %p310 = pneg %p110
        $region58: #{tpu_custom_call.1} parent=47 // pred_check_branch
          %312 = sbr.rel (%p310) target = $region60
        $region59: #{tpu_custom_call.1} parent=47 // pred_region
          %314 = dma.done [#allocation6], 2048
        $region60: #{tpu_custom_call.1} parent=47 // pred_fallthru
          _
        // Predicated region
        $region61: #{tpu_custom_call.1} parent=47 // pred_check
          %p315 = pneg %p152
        $region62: #{tpu_custom_call.1} parent=47 // pred_check_branch
          %317 = sbr.rel (%p315) target = $region64
        $region63: #{tpu_custom_call.1} parent=47 // pred_region
          %319 = dma.done [#allocation9], 2048
        $region64: #{tpu_custom_call.1} parent=47 // pred_fallthru
          _
        %s320 = sand.u32 %s34, 1
        %s321 = scalar_lea.sflag [#allocation3], %s320
        %s322 = sand.u32 %s34, 1
        %s323 = smul.addr %s322, 8
        %s324 = scalar_lea.vmem [#allocation2], %s323
        %p325 = pneg %p47
        %p326 = pneg %p44
        %p327 = pneg %p68
        %p328 = pneg %p65
        %p329 = pneg %p89
        %p330 = pneg %p86
        %p331 = pneg %p110
        %p332 = pneg %p107
        %p333 = pneg %p131
        %p334 = pneg %p128
        %p335 = pneg %p152
        %p336 = pneg %p149
        %p337 = pneg %p173
        %p338 = pneg %p170
        %p339 = pneg %p199
        %p340 = pneg %p196
        %s341 = sand.u32 %s186, 1
        %s342 = scalar_lea.sflag [#allocation4], %s341
        %s343 = sand.u32 %s186, 1
        %s344 = smul.addr %s343, 8
        %s345 = scalar_lea.vmem [#allocation10], %s344
        %v346 = vld [vmem:[%s299] sm:$0xff]
        %v347 = vld [vmem:[#allocation5] sm:$0xff]
        %v348 = vld [vmem:[#allocation5 + $0x8] sm:$0xff]
        %v349 = vld [vmem:[#allocation5 + $0x10] sm:$0xff]
        %v350 = vld [vmem:[#allocation5 + $0x18] sm:$0xff]
        %v351 = vld [vmem:[#allocation5 + $0x20] sm:$0xff]
        %v352 = vld [vmem:[#allocation5 + $0x28] sm:$0xff]
        %v353 = vld [vmem:[#allocation5 + $0x30] sm:$0xff]
        %v354 = vld [vmem:[#allocation5 + $0x38] sm:$0xff]
        %v355 = vld [vmem:[#allocation5 + $0x40] sm:$0xff]
        %v356 = vld [vmem:[#allocation5 + $0x48] sm:$0xff]
        %v357 = vld [vmem:[#allocation5 + $0x50] sm:$0xff]
        %v358 = vld [vmem:[#allocation5 + $0x58] sm:$0xff]
        %v359 = vld [vmem:[#allocation5 + $0x60] sm:$0xff]
        %v360 = vld [vmem:[#allocation5 + $0x68] sm:$0xff]
        %v361 = vld [vmem:[#allocation5 + $0x70] sm:$0xff]
        %v362 = vld [vmem:[#allocation5 + $0x78] sm:$0xff]
        %v363 = vld [vmem:[%s2] sm:$0x1]
        %v365 = vperm.slane %v363, 0
        %367 = vmatpush.msra.mxu0 %v362
        %368 = vmatpush.msra.mxu0 %v361
        %369 = vmatpush.msra.mxu0 %v360
        %370 = vmatpush.msra.mxu0 %v359
        %371 = vmatpush.msra.mxu0 %v358
        %372 = vmatpush.msra.mxu0 %v357
        %373 = vmatpush.msra.mxu0 %v356
        %374 = vmatpush.msra.mxu0 %v355
        %375 = vmatpush.msra.mxu0 %v354
        %376 = vmatpush.msra.mxu0 %v353
        %377 = vmatpush.msra.mxu0 %v352
        %378 = vmatpush.msra.mxu0 %v351
        %379 = vmatpush.msra.mxu0 %v350
        %380 = vmatpush.msra.mxu0 %v349
        %381 = vmatpush.msra.mxu0 %v348
        %382 = vmatpush.msra.mxu0 %v347
        %383 = vmatmul.f32.gmra.mxu0 %v346
        %v384 = vpop.f32.mrf.mxu0
        %v385 = vadd.f32 %v365, %v384
        %386 = vdwg.mxu0
        %v387 = vmax.f32 %v385, 0.0
        %v388 = vld [vmem:[#allocation7] sm:$0xff]
        %v389 = vld [vmem:[#allocation7 + $0x8] sm:$0xff]
        %v390 = vld [vmem:[#allocation7 + $0x10] sm:$0xff]
        %v391 = vld [vmem:[#allocation7 + $0x18] sm:$0xff]
        %v392 = vld [vmem:[#allocation7 + $0x20] sm:$0xff]
        %v393 = vld [vmem:[#allocation7 + $0x28] sm:$0xff]
        %v394 = vld [vmem:[#allocation7 + $0x30] sm:$0xff]
        %v395 = vld [vmem:[#allocation7 + $0x38] sm:$0xff]
        %v396 = vld [vmem:[#allocation7 + $0x40] sm:$0xff]
        %v397 = vld [vmem:[#allocation7 + $0x48] sm:$0xff]
        %v398 = vld [vmem:[#allocation7 + $0x50] sm:$0xff]
        %v399 = vld [vmem:[#allocation7 + $0x58] sm:$0xff]
        %v400 = vld [vmem:[#allocation7 + $0x60] sm:$0xff]
        %v401 = vld [vmem:[#allocation7 + $0x68] sm:$0xff]
        %v402 = vld [vmem:[#allocation7 + $0x70] sm:$0xff]
        %v403 = vld [vmem:[#allocation7 + $0x78] sm:$0xff]
        %v404 = vld [vmem:[%s4] sm:$0x1]
        %v406 = vperm.slane %v404, 0
        %408 = vmatpush.msra.mxu0 %v403
        %409 = vmatpush.msra.mxu0 %v402
        %410 = vmatpush.msra.mxu0 %v401
        %411 = vmatpush.msra.mxu0 %v400
        %412 = vmatpush.msra.mxu0 %v399
        %413 = vmatpush.msra.mxu0 %v398
        %414 = vmatpush.msra.mxu0 %v397
        %415 = vmatpush.msra.mxu0 %v396
        %416 = vmatpush.msra.mxu0 %v395
        %417 = vmatpush.msra.mxu0 %v394
        %418 = vmatpush.msra.mxu0 %v393
        %419 = vmatpush.msra.mxu0 %v392
        %420 = vmatpush.msra.mxu0 %v391
        %421 = vmatpush.msra.mxu0 %v390
        %422 = vmatpush.msra.mxu0 %v389
        %423 = vmatpush.msra.mxu0 %v388
        %424 = vmatmul.f32.gmra.mxu0 %v387
        %v425 = vpop.f32.mrf.mxu0
        %v426 = vadd.f32 %v406, %v425
        %427 = vdwg.mxu0
        %v428 = vmax.f32 %v426, 0.0
        %v429 = vld [vmem:[#allocation8] sm:$0xff]
        %v430 = vld [vmem:[#allocation8 + $0x8] sm:$0xff]
        %v431 = vld [vmem:[#allocation8 + $0x10] sm:$0xff]
        %v432 = vld [vmem:[#allocation8 + $0x18] sm:$0xff]
        %v433 = vld [vmem:[#allocation8 + $0x20] sm:$0xff]
        %v434 = vld [vmem:[#allocation8 + $0x28] sm:$0xff]
        %v435 = vld [vmem:[#allocation8 + $0x30] sm:$0xff]
        %v436 = vld [vmem:[#allocation8 + $0x38] sm:$0xff]
        %v437 = vld [vmem:[#allocation8 + $0x40] sm:$0xff]
        %v438 = vld [vmem:[#allocation8 + $0x48] sm:$0xff]
        %v439 = vld [vmem:[#allocation8 + $0x50] sm:$0xff]
        %v440 = vld [vmem:[#allocation8 + $0x58] sm:$0xff]
        %v441 = vld [vmem:[#allocation8 + $0x60] sm:$0xff]
        %v442 = vld [vmem:[#allocation8 + $0x68] sm:$0xff]
        %v443 = vld [vmem:[#allocation8 + $0x70] sm:$0xff]
        %v444 = vld [vmem:[#allocation8 + $0x78] sm:$0xff]
        %v445 = vld [vmem:[%s6] sm:$0x1]
        %v447 = vperm.slane %v445, 0
        %449 = vmatpush.msra.mxu0 %v444
        %450 = vmatpush.msra.mxu0 %v443
        %451 = vmatpush.msra.mxu0 %v442
        %452 = vmatpush.msra.mxu0 %v441
        %453 = vmatpush.msra.mxu0 %v440
        %454 = vmatpush.msra.mxu0 %v439
        %455 = vmatpush.msra.mxu0 %v438
        %456 = vmatpush.msra.mxu0 %v437
        %457 = vmatpush.msra.mxu0 %v436
        %458 = vmatpush.msra.mxu0 %v435
        %459 = vmatpush.msra.mxu0 %v434
        %460 = vmatpush.msra.mxu0 %v433
        %461 = vmatpush.msra.mxu0 %v432
        %462 = vmatpush.msra.mxu0 %v431
        %463 = vmatpush.msra.mxu0 %v430
        %464 = vmatpush.msra.mxu0 %v429
        %465 = vmatmul.f32.gmra.mxu0 %v428
        %v466 = vpop.f32.mrf.mxu0
        %v467 = vadd.f32 %v447, %v466
        %468 = vdwg.mxu0
        %469 = vst [vmem:[%s345] sm:$0xff] %v467
        %s470 = sand.u32 %s186, 1
        %s471 = scalar_lea.sflag [#allocation4], %s470
        %s472 = sand.u32 %s186, 1
        %s473 = smul.addr %s472, 8
        %s474 = scalar_lea.vmem [#allocation10], %s473
        // Predicated region
        $region65: #{tpu_custom_call.1} parent=47 // pred_check
          %p475 = pneg %p196
        $region66: #{tpu_custom_call.1} parent=47 // pred_check_branch
          %477 = sbr.rel (%p475) target = $region68
        $region67: #{tpu_custom_call.1} parent=47 // pred_region
          %479 = vsyncadd %s471, 0
          %s480 = smul.addr %s26, 8
          %s481 = scalar_lea.hbm %s7, %s480
          %s483 = sshll.u32 %s474, 4
          %s484 = int_to_ptr.vmem [resolvable:$true] %s483
          %s485 = sshll.u32 %s481, 4
          %s486 = int_to_ptr.hbm [resolvable:$true] %s485
          %488 = dma.vmem_to_hbm [thread:$0]  %s484, 128, %s486, %s471
        $region68: #{tpu_custom_call.1} parent=47 // pred_fallthru
          _
      $region48: #{tpu_custom_call.1} parent=5 // pred_fallthru
        _
      %p489 = scmp.le.s32.totalorder 2, %s21
      // Predicated region
      $region69: #{tpu_custom_call.1} parent=5 // pred_check
        %p490 = pneg %p489
      $region70: #{tpu_custom_call.1} parent=5 // pred_check_branch
        %492 = sbr.rel (%p490) target = $region72
      $region71: #{tpu_custom_call.1} parent=5 // pred_region
        %s493 = ssub.s32 %s21, 2
        // Predicated region
        $region73: #{tpu_custom_call.1} parent=71 // pred_check
          %p494 = pneg %p202
        $region74: #{tpu_custom_call.1} parent=71 // pred_check_branch
          %496 = sbr.rel (%p494) target = $region76
        $region75: #{tpu_custom_call.1} parent=71 // pred_region
          %s497 = sand.u32 %s187, 1
          %s498 = scalar_lea.sflag [#allocation4], %s497
          %s499 = sand.u32 %s187, 1
          %s500 = smul.addr %s499, 8
          %s501 = scalar_lea.vmem [#allocation10], %s500
          %503 = dma.done %s498, 128
        $region76: #{tpu_custom_call.1} parent=71 // pred_fallthru
          _
      $region72: #{tpu_custom_call.1} parent=5 // pred_fallthru
        _
    $region6: #{tpu_custom_call.1} parent=1 // loop_footer
      %s25 = sadd.s32 1, %s21
    $region7: #{tpu_custom_call.1} parent=1 // loop_footer_branch
      %20 = sbr.rel target = $region3
    $region8: #{tpu_custom_call.1} parent=1 // loop_exit
      _
    %504 = vsyncpa [#allocation3], 1
    %s505 = scalar_lea.sflag [#allocation3], 1
    %506 = vsyncpa %s505, 1
    %507 = vsyncpa [#allocation6], 1
    %508 = vsyncpa [#allocation9], 1
    %509 = vsyncpa [#allocation4], 1
    %s510 = scalar_lea.sflag [#allocation4], 1
    %511 = vsyncpa %s510, 1

// kernel: tpu_custom_call.1
$region0: #{tpu_custom_call.1}
  #allocation0 [shape = 'u32[]', space=smem, size = 0x4, offset = 0x4, fixed_abs, tag = 'smem constant byte address 0x4 - core index']
  #allocation1 [shape = 'u32[72,128]{1,0:T(1,128)}', space=vmem, size = 0x9000, scoped, tag = 'internal scratch']
  #allocation2 [shape = 'f32[16,128]{1,0:T(8,128)}', space=vmem, size = 0x2000, scoped, tag = 'scratch operand']
  %s0 = inlined_call_operand.hbm [shape: f32[16,128], index: 0, kind: input, shape index: {}]
  %s1 = inlined_call_operand.hbm [shape: f32[128,128], index: 1, kind: input, shape index: {}]
  %s2 = inlined_call_operand.vmem [shape: f32[1,128], index: 2, kind: input, shape index: {}]
  %s3 = inlined_call_operand.hbm [shape: f32[16,128], index: 3, kind: output, shape index: {}]
  %s4 = sld [smem:[#allocation0]]
  $region38: #{tpu_custom_call.1} parent=0
    _
  %s6 = ssub.s32 1, %s4
  %s7 = scalar_select 0, %s6, %s4
  $region1: #{tpu_custom_call.1} parent=0
    #allocation3 [shape = 'u8[8192]{0}', space=vmem, size = 0x2000, scoped, tag = 'input window, operand 0, single buffered']
    #allocation4 [shape = 's32[1]{0}', space=sflag, size = 0x4, scoped, tag = 'scoped memory for tpu_custom_call.1']
    #allocation5 [shape = 's32[1]{0}', space=sflag, size = 0x4, scoped, tag = 'scoped memory for tpu_custom_call.1']
    #allocation6 [shape = 'u8[65536]{0}', space=vmem, size = 0x10000, scoped, tag = 'input window, operand 1, single buffered']
    #allocation7 [shape = 's32[1]{0}', space=sflag, size = 0x4, scoped, tag = 'scoped memory for tpu_custom_call.1']
    #allocation8 [shape = 'u8[8192]{0}', space=vmem, size = 0x2000, scoped, tag = 'output window, operand 0, single buffered']
    %8 = vsyncpa [#allocation4], 0
    %9 = vsyncpa [#allocation7], 0
    %10 = vsyncpa [#allocation5], 0
    // Predicated region
    $region2: #{tpu_custom_call.1} parent=1 // pred_check
      _
    $region3: #{tpu_custom_call.1} parent=1 // pred_check_branch
      %12 = sbr.rel (0) target = $region5
    $region4: #{tpu_custom_call.1} parent=1 // pred_region
      %14 = vsyncadd [#allocation4], 0
      %s15 = sshll.u32 %s0, 4
      %s16 = int_to_ptr.hbm [resolvable:$true] %s15
      %s17 = sshll.u32 [#allocation3], 4
      %s18 = int_to_ptr.vmem [resolvable:$true] %s17
      %23 = dma.hbm_to_vmem [thread:$0]  %s16, 256, %s18, [#allocation4], 128, 128, 8
    $region5: #{tpu_custom_call.1} parent=1 // pred_fallthru
      _
    // Predicated region
    $region6: #{tpu_custom_call.1} parent=1 // pred_check
      _
    $region7: #{tpu_custom_call.1} parent=1 // pred_check_branch
      %25 = sbr.rel (0) target = $region9
    $region8: #{tpu_custom_call.1} parent=1 // pred_region
      %27 = vsyncadd [#allocation7], 0
      %s28 = sshll.u32 %s1, 4
      %s29 = int_to_ptr.hbm [resolvable:$true] %s28
      %s30 = sshll.u32 [#allocation6], 4
      %s31 = int_to_ptr.vmem [resolvable:$true] %s30
      %36 = dma.hbm_to_vmem [thread:$0]  %s29, 2048, %s31, [#allocation7], 128, 128, 8
    $region9: #{tpu_custom_call.1} parent=1 // pred_fallthru
      _
    // Predicated region
    $region10: #{tpu_custom_call.1} parent=1 // pred_check
      _
    $region11: #{tpu_custom_call.1} parent=1 // pred_check_branch
      %38 = sbr.rel (0) target = $region13
    $region12: #{tpu_custom_call.1} parent=1 // pred_region
      _
    $region13: #{tpu_custom_call.1} parent=1 // pred_fallthru
      _
    // Predicated region
    $region14: #{tpu_custom_call.1} parent=1 // pred_check
      _
    $region15: #{tpu_custom_call.1} parent=1 // pred_check_branch
      %40 = sbr.rel (0) target = $region17
    $region16: #{tpu_custom_call.1} parent=1 // pred_region
      %42 = dma.done [#allocation4], 256
    $region17: #{tpu_custom_call.1} parent=1 // pred_fallthru
      _
    // Predicated region
    $region18: #{tpu_custom_call.1} parent=1 // pred_check
      _
    $region19: #{tpu_custom_call.1} parent=1 // pred_check_branch
      %44 = sbr.rel (0) target = $region21
    $region20: #{tpu_custom_call.1} parent=1 // pred_region
      %46 = dma.done [#allocation7], 2048
    $region21: #{tpu_custom_call.1} parent=1 // pred_fallthru
      _
    %p47 = scmp.eq.s32.totalorder 0, 0
    // Predicated region
    $region22: #{tpu_custom_call.1} parent=1 // pred_check
      %p48 = pneg %p47
    $region23: #{tpu_custom_call.1} parent=1 // pred_check_branch
      %50 = sbr.rel (%p48) target = $region25
    $region24: #{tpu_custom_call.1} parent=1 // pred_region
      %51 = vst [vmem:[#allocation2] sm:$0xff] 0.0
      %52 = vst [vmem:[#allocation2 + $0x8] sm:$0xff] 0.0
    $region25: #{tpu_custom_call.1} parent=1 // pred_fallthru
      _
    %v53 = vld [vmem:[#allocation2] sm:$0xff]
    %v54 = vld [vmem:[#allocation2 + $0x8] sm:$0xff]
    %v55 = vld [vmem:[#allocation3] sm:$0xff]
    %v56 = vld [vmem:[#allocation3 + $0x8] sm:$0xff]
    %v57 = vld [vmem:[#allocation6] sm:$0xff]
    %v58 = vld [vmem:[#allocation6 + $0x8] sm:$0xff]
    %v59 = vld [vmem:[#allocation6 + $0x10] sm:$0xff]
    %v60 = vld [vmem:[#allocation6 + $0x18] sm:$0xff]
    %v61 = vld [vmem:[#allocation6 + $0x20] sm:$0xff]
    %v62 = vld [vmem:[#allocation6 + $0x28] sm:$0xff]
    %v63 = vld [vmem:[#allocation6 + $0x30] sm:$0xff]
    %v64 = vld [vmem:[#allocation6 + $0x38] sm:$0xff]
    %v65 = vld [vmem:[#allocation6 + $0x40] sm:$0xff]
    %v66 = vld [vmem:[#allocation6 + $0x48] sm:$0xff]
    %v67 = vld [vmem:[#allocation6 + $0x50] sm:$0xff]
    %v68 = vld [vmem:[#allocation6 + $0x58] sm:$0xff]
    %v69 = vld [vmem:[#allocation6 + $0x60] sm:$0xff]
    %v70 = vld [vmem:[#allocation6 + $0x68] sm:$0xff]
    %v71 = vld [vmem:[#allocation6 + $0x70] sm:$0xff]
    %v72 = vld [vmem:[#allocation6 + $0x78] sm:$0xff]
    %73 = vmatpush.msra.mxu0 %v72
    %74 = vmatpush.msra.mxu0 %v71
    %75 = vmatpush.msra.mxu0 %v70
    %76 = vmatpush.msra.mxu0 %v69
    %77 = vmatpush.msra.mxu0 %v68
    %78 = vmatpush.msra.mxu0 %v67
    %79 = vmatpush.msra.mxu0 %v66
    %80 = vmatpush.msra.mxu0 %v65
    %81 = vmatpush.msra.mxu0 %v64
    %82 = vmatpush.msra.mxu0 %v63
    %83 = vmatpush.msra.mxu0 %v62
    %84 = vmatpush.msra.mxu0 %v61
    %85 = vmatpush.msra.mxu0 %v60
    %86 = vmatpush.msra.mxu0 %v59
    %87 = vmatpush.msra.mxu0 %v58
    %88 = vmatpush.msra.mxu0 %v57
    %89 = vmatmul.f32.gmra.mxu0 %v55
    %v90 = vpop.f32.mrf.mxu0
    %v91 = vadd.f32 0.0, %v90
    %92 = vmatmul.f32.gmra.mxu0 %v56
    %v93 = vpop.f32.mrf.mxu0
    %v94 = vadd.f32 0.0, %v93
    %95 = vdwg.mxu0
    %v96 = vadd.f32 %v53, %v91
    %v97 = vadd.f32 %v54, %v94
    %98 = vst [vmem:[#allocation2] sm:$0xff] %v96
    %99 = vst [vmem:[#allocation2 + $0x8] sm:$0xff] %v97
    // Predicated region
    $region26: #{tpu_custom_call.1} parent=1 // pred_check
      %p100 = pneg %p47
    $region27: #{tpu_custom_call.1} parent=1 // pred_check_branch
      %102 = sbr.rel (%p100) target = $region29
    $region28: #{tpu_custom_call.1} parent=1 // pred_region
      %v103 = vld [vmem:[#allocation2] sm:$0xff]
      %v104 = vld [vmem:[#allocation2 + $0x8] sm:$0xff]
      %v105 = vld [vmem:[%s2] sm:$0x1]
      %v107 = vperm.slane %v105, 0
      %v109 = vadd.f32 %v103, %v107
      %v110 = vadd.f32 %v104, %v107
      %v111 = vmax.f32 %v109, 0.0
      %v112 = vmax.f32 %v110, 0.0
      %113 = vst [vmem:[#allocation8] sm:$0xff] %v111
      %114 = vst [vmem:[#allocation8 + $0x8] sm:$0xff] %v112
    $region29: #{tpu_custom_call.1} parent=1 // pred_fallthru
      _
    // Predicated region
    $region30: #{tpu_custom_call.1} parent=1 // pred_check
      _
    $region31: #{tpu_custom_call.1} parent=1 // pred_check_branch
      %116 = sbr.rel (0) target = $region33
    $region32: #{tpu_custom_call.1} parent=1 // pred_region
      %118 = vsyncadd [#allocation5], 0
      %s119 = sshll.u32 [#allocation8], 4
      %s120 = int_to_ptr.vmem [resolvable:$true] %s119
      %s121 = sshll.u32 %s3, 4
      %s122 = int_to_ptr.hbm [resolvable:$true] %s121
      %127 = dma.vmem_to_hbm [thread:$0]  %s120, 256, %s122, [#allocation5], 128, 128, 8
    $region33: #{tpu_custom_call.1} parent=1 // pred_fallthru
      _
    // Predicated region
    $region34: #{tpu_custom_call.1} parent=1 // pred_check
      _
    $region35: #{tpu_custom_call.1} parent=1 // pred_check_branch
      %129 = sbr.rel (0) target = $region37
    $region36: #{tpu_custom_call.1} parent=1 // pred_region
      %131 = dma.done [#allocation5], 256
    $region37: #{tpu_custom_call.1} parent=1 // pred_fallthru
      _
    %132 = vsyncpa [#allocation4], 1
    %133 = vsyncpa [#allocation7], 1
    %134 = vsyncpa [#allocation5], 1

</llo_original>
